<compile_context>
chip_gen: v7x
topology: tpu7x:2x2x1
jax: 0.10.0
libtpu: 0.0.40
codegen_flags: <defaults>
</compile_context>

<pallas_src>
import functools

import jax
import jax.numpy as jnp
from jax import lax
from jax.experimental import pallas as pl
from jax.experimental.pallas import tpu as pltpu


def _round_up(x: int, m: int) -> int:
    return ((x + m - 1) // m) * m


def _sublane_multiple(dtype) -> int:
    # Native sublane packing: f32 -> 8, bf16 -> 16, int8/fp8 -> 32.
    return {4: 8, 2: 16, 1: 32}.get(jnp.dtype(dtype).itemsize, 8)


def _a_block_spec(tm: int, tk: int, buffers: int):
    """BlockSpec for the streamed A tile; request deeper pipelining when supported."""
    index_map = lambda i, k: (i, k)
    if buffers > 2 and hasattr(pl, "Buffered"):
        try:
            return pl.BlockSpec((tm, tk), index_map,
                                pipeline_mode=pl.Buffered(buffers))
        except TypeError:
            pass
    return pl.BlockSpec((tm, tk), index_map)


def preprocess_adjacency(adj, *, tm=512, tk=1024, adj_dtype=jnp.bfloat16):
    """One-time, CACHEABLE adjacency preprocessing (the graph is static in a GCN).

    Casts A to `adj_dtype` (bf16 is exact for 0/1 edges), zero-pads to the tile grid,
    and computes the clamped-degree rsqrt norms.  Reuse the returned dict across all
    layers / training steps so each layer only streams A once.
    adj[dst, src] = 1 for an edge src -> dst.
    """
    N = adj.shape[0]
    sub = _sublane_multiple(adj_dtype)
    tm = max(sub, min(tm, _round_up(N, sub)))
    tk = max(128, min(tk, _round_up(N, 128)))
    # Guarantee >= 2 row tiles when possible so the "parallel" row axis feeds both
    # v7x TensorCores instead of idling one.
    if _round_up(N, tm) == tm and _round_up(N, sub) >= 2 * sub:
        tm = _round_up(-(-N // 2), sub)
    n_m = _round_up(N, tm)
    n_k = _round_up(N, tk)

    adj_p = jnp.pad(adj.astype(adj_dtype), ((0, n_m - N), (0, n_k - N)))
    # Degrees from the already-cast/padded copy (0/1 exact; f32 accumulation).
    out_deg = jnp.maximum(jnp.sum(adj_p, axis=0, dtype=jnp.float32), 1.0)  # (n_k,)
    in_deg = jnp.maximum(jnp.sum(adj_p, axis=1, dtype=jnp.float32), 1.0)   # (n_m,)
    return dict(
        adj_p=adj_p,
        norm_src=lax.rsqrt(out_deg).reshape(n_k, 1),   # rsqrt(out-degree), per src node
        norm_dst=lax.rsqrt(in_deg).reshape(n_m, 1),    # rsqrt(in-degree),  per dst node
        n=N, n_m=n_m, n_k=n_k, tm=tm, tk=tk,
    )


def _gcn_agg_kernel(*refs, project_first, acc_in_out, negative_slope):
    """Grid = (row tiles of output, K-reduction tiles over adjacency columns).

    refs (project_first): a(tm,tk), x(tk,fp), ndst(tm,1), b(1,fp), o(tm,fp) [, acc(tm,fp)]
    refs (project-after): a(tm,tk), x(tk,fi_p), ndst(tm,1), w(fi_p,fp), b(1,fp),
                          o(tm,fp), acc(tm,fi_p)
    """
    if project_first:
        a_ref, x_ref, ndst_ref, b_ref, o_ref = refs[:5]
        w_ref = None
        acc_ref = o_ref if acc_in_out else refs[5]
    else:
        a_ref, x_ref, ndst_ref, w_ref, b_ref, o_ref, acc_ref = refs

    k = pl.program_id(1)

    @pl.when(k == 0)
    def _init():
        acc_ref[...] = jnp.zeros_like(acc_ref)

    # The only per-(i, k) work: one MXU matmul on the streamed A tile.  The out-degree
    # norm and (for project_first) the W projection were hoisted into X in the wrapper.
    acc_ref[...] += jnp.dot(a_ref[...], x_ref[...],
                            preferred_element_type=jnp.float32)

    @pl.when(k == pl.num_programs(1) - 1)
    def _finalize():
        # Deferred in-degree (dst) norm, fused with bias + LeakyReLU epilogue.
        acc = acc_ref[...].astype(jnp.float32) * ndst_ref[...]
        if not project_first:
            acc = jnp.dot(acc, w_ref[...], preferred_element_type=jnp.float32)
        z = acc + b_ref[...]
        o_ref[...] = jnp.where(z > 0.0, z, negative_slope * z).astype(o_ref.dtype)
        # TODO(synk): nn.Dropout(0.1) on the last layer is identity in eval mode; not applied.


def gcn_layer(prep, h, w, b, *, out_dtype=jnp.bfloat16, negative_slope=0.01,
              a_buffers=3, x_dtype=None, vmem_limit_bytes=48 * 1024 * 1024):
    """One GCN layer: LeakyReLU(both-norm GraphConv(adj, h) @ w + b).

    `prep` is the (cached) result of preprocess_adjacency(adj, ...).
    h: (N, f_in) f32; w: (f_in, f_out); b: (f_out,) or (1, f_out).
    """
    N, f_in = h.shape
    f_out = w.shape[1]
    assert prep["n"] == N, "preprocessed adjacency does not match h"
    adj_p, norm_src, norm_dst = prep["adj_p"], prep["norm_src"], prep["norm_dst"]
    n_m, n_k, tm, tk = prep["n_m"], prep["n_k"], prep["tm"], prep["tk"]

    fp = _round_up(f_out, 128)       # lane-dense output width
    fi_p = _round_up(f_in, 128)      # lane-dense input-feature width
    # Project before aggregation unless it would widen the N^2 matmul's RHS
    # (compare lane-PADDED widths; prefer projecting on ties).
    project_first = fp <= fi_p
    xw = fp if project_first else fi_p
    if x_dtype is None:
        # Match the A stream: bf16 fast path, f32 exact path.
        x_dtype = jnp.float32 if adj_p.dtype == jnp.float32 else jnp.bfloat16
    # TODO(synk): on v7x, adj could be stored as fp8 (exact for 0/1) to halve the
    # dominant HBM stream, if the lowering accepts fp8 x bf16 (else cast X too).

    # ---- hoisted one-shot prep: fold out-degree norm into H, apply W once ----
    h_p = jnp.pad(h.astype(jnp.float32), ((0, n_k - N), (0, 0))) * norm_src
    if project_first:
        x = jnp.dot(h_p, w.astype(jnp.float32), preferred_element_type=jnp.float32)
        x = jnp.pad(x, ((0, 0), (0, fp - f_out)))
    else:
        x = jnp.pad(h_p, ((0, 0), (0, fi_p - f_in)))
    x = x.astype(x_dtype)                                        # (n_k, xw), cast ONCE

    b_p = jnp.pad(jnp.asarray(b, jnp.float32).reshape(1, f_out),
                  ((0, 0), (0, fp - f_out)))

    # Accumulate straight into the resident output tile when it is f32 and already
    # projection-width; otherwise one (tm, xw) f32 scratch.
    acc_in_out = project_first and jnp.dtype(out_dtype) == jnp.dtype(jnp.float32)

    kernel = functools.partial(_gcn_agg_kernel, project_first=project_first,
                               acc_in_out=acc_in_out, negative_slope=negative_slope)

    def build_and_run(buffers):
        in_specs = [
            _a_block_spec(tm, tk, buffers),                   # A tile (streamed per (i,k))
            pl.BlockSpec((tk, xw), lambda i, k: (k, 0)),      # X tile (src nodes)
            pl.BlockSpec((tm, 1), lambda i, k: (i, 0)),       # rsqrt(in_deg) per dst row
        ]
        args = [adj_p, x, norm_dst]
        if not project_first:
            w_p = jnp.pad(w.astype(jnp.float32),
                          ((0, fi_p - f_in), (0, fp - f_out)))
            in_specs.append(pl.BlockSpec((fi_p, fp), lambda i, k: (0, 0)))   # W (resident)
            args.append(w_p)
        in_specs.append(pl.BlockSpec((1, fp), lambda i, k: (0, 0)))          # bias
        args.append(b_p)
        scratch = [] if acc_in_out else [pltpu.VMEM((tm, xw), jnp.float32)]

        return pl.pallas_call(
            kernel,
            out_shape=jax.ShapeDtypeStruct((n_m, fp), out_dtype),
            grid_spec=pltpu.PrefetchScalarGridSpec(
                num_scalar_prefetch=0,
                grid=(n_m // tm, n_k // tk),            # (row tiles, K-reduction tiles)
                in_specs=in_specs,
                out_specs=pl.BlockSpec((tm, fp), lambda i, k: (i, 0)),
                scratch_shapes=scratch,
            ),
            compiler_params=pltpu.CompilerParams(
                dimension_semantics=("parallel", "arbitrary"),
                vmem_limit_bytes=vmem_limit_bytes,      # <= ~48 MiB stays within v7x VMEM
            ),
        )(*args)

    try:
        out_p = build_and_run(a_buffers)
    except Exception:
        # Deeper A buffering unsupported on this version -> default double-buffering.
        if a_buffers <= 2:
            raise
        out_p = build_and_run(2)

    return out_p[:N, :f_out]


def gcn_layer_ref(adj, h, w, b, *, negative_slope=0.01):
    out_deg = jnp.maximum(adj.sum(axis=0), 1.0)
    in_deg = jnp.maximum(adj.sum(axis=1), 1.0)
    hs = h * lax.rsqrt(out_deg)[:, None]
    agg = (adj @ hs) * lax.rsqrt(in_deg)[:, None]
    z = agg @ w + jnp.asarray(b, jnp.float32).reshape(1, -1)
    return jnp.where(z > 0, z, negative_slope * z)


if __name__ == "__main__":
    key = jax.random.PRNGKey(0)
    N, F_IN, F_OUT = 64, 32, 32   # config.gnn_in_dim / config.gnn_out_dim

    k_adj, k_h, k_w, k_w2, k_b2 = jax.random.split(key, 5)

    # Random sparse-ish graph as dense adjacency (adj[dst, src]); zero-degree nodes OK.
    adj = (jax.random.uniform(k_adj, (N, N)) < 0.1).astype(jnp.float32)
    h = jax.random.normal(k_h, (N, F_IN), dtype=jnp.float32)

    # GraphConv params: xavier-uniform weight, zero bias.
    limit = jnp.sqrt(6.0 / (F_IN + F_OUT))
    w = jax.random.uniform(k_w, (F_IN, F_OUT), minval=-limit, maxval=limit,
                           dtype=jnp.float32)
    b = jnp.zeros((1, F_OUT), dtype=jnp.float32)

    ref = gcn_layer_ref(adj, h, w, b)

    # Exact-path check: f32 adjacency / X streams, f32 output accumulated in place.
    prep_f32 = preprocess_adjacency(adj, adj_dtype=jnp.float32)
    out_f32 = jax.block_until_ready(gcn_layer(prep_f32, h, w, b, out_dtype=jnp.float32))
    assert jnp.allclose(out_f32, ref, atol=1e-3, rtol=1e-3), "f32 path mismatch vs reference"

    # Default fast path: bf16 A/X streams (0/1 adjacency exact, f32 accumulation),
    # bf16 output.  `prep` is built once and reused by every layer (cached adjacency).
    prep = preprocess_adjacency(adj)
    out = jax.block_until_ready(gcn_layer(prep, h, w, b))
    assert jnp.allclose(out.astype(jnp.float32), ref, atol=3e-2, rtol=3e-2), \
        "bf16 path mismatch vs reference"

    # Wide-output layer (f_out padded > f_in padded) exercises the project-after path
    # and reuses the same cached adjacency preprocessing.
    F_OUT2 = 160
    limit2 = jnp.sqrt(6.0 / (F_IN + F_OUT2))
    w2 = jax.random.uniform(k_w2, (F_IN, F_OUT2), minval=-limit2, maxval=limit2,
                            dtype=jnp.float32)
    b2 = 0.1 * jax.random.normal(k_b2, (1, F_OUT2), dtype=jnp.float32)
    ref2 = gcn_layer_ref(adj, h, w2, b2)
    out2 = jax.block_until_ready(gcn_layer(prep, h, w2, b2))
    assert jnp.allclose(out2.astype(jnp.float32), ref2, atol=3e-2, rtol=3e-2), \
        "project-after path mismatch vs reference"

    print("KERNEL_OK")
</pallas_src>

<mosaic_0001>
module attributes {stable_mosaic.version = 11 : i64} {
  func.func @_gcn_agg_kernel(%arg0: i32, %arg1: i32, %arg2: memref<32x128xf32, #tpu.memory_space<vmem>>, %arg3: memref<128x128xf32, #tpu.memory_space<vmem>>, %arg4: memref<32x1xf32, #tpu.memory_space<vmem>>, %arg5: memref<1x128xf32, #tpu.memory_space<vmem>>, %arg6: memref<32x128xf32, #tpu.memory_space<vmem>>) attributes {dimension_semantics = [#tpu.dimension_semantics<parallel>, #tpu.dimension_semantics<arbitrary>], iteration_bounds = array<i64: 2, 1>, scalar_prefetch = 0 : i64, scratch_operands = 0 : i64, tpu.core_type = #tpu.core_type<tc>, window_params = [{transform_indices = @transform_0, window_bounds = array<i64: 32, 128>}, {transform_indices = @transform_1, window_bounds = array<i64: 128, 128>}, {transform_indices = @transform_2, window_bounds = array<i64: 32, 1>}, {pipeline_mode = #tpu.pipeline_mode<synchronous>, transform_indices = @transform_3, window_bounds = array<i64: 1, 128>}, {transform_indices = @transform_4, window_bounds = array<i64: 32, 128>}]} {
    %c0_i32 = arith.constant 0 : i32
    %0 = arith.cmpi eq, %arg1, %c0_i32 : i32
    %1 = arith.extui %0 : i1 to i32
    %c0_i32_0 = arith.constant 0 : i32
    %2 = arith.cmpi ne, %1, %c0_i32_0 : i32
    scf.if %2 {
      %cst_10 = arith.constant 0.000000e+00 : f32
      %12 = vector.broadcast %cst_10 : f32 to vector<32x128xf32>
      %c0_11 = arith.constant 0 : index
      %c0_12 = arith.constant 0 : index
      %13 = vector.load %arg6[%c0_11, %c0_12] : memref<32x128xf32, #tpu.memory_space<vmem>>, vector<32x128xf32>
      tpu.vector_store %arg6[%c0_11, %c0_12], %12 {strides = array<i32>} : memref<32x128xf32, #tpu.memory_space<vmem>>, vector<32x128xf32>,
    } else {
    }
    %c0 = arith.constant 0 : index
    %c0_1 = arith.constant 0 : index
    %3 = vector.load %arg6[%c0, %c0_1] : memref<32x128xf32, #tpu.memory_space<vmem>>, vector<32x128xf32>
    %c0_2 = arith.constant 0 : index
    %c0_3 = arith.constant 0 : index
    %4 = vector.load %arg2[%c0_2, %c0_3] : memref<32x128xf32, #tpu.memory_space<vmem>>, vector<32x128xf32>
    %c0_4 = arith.constant 0 : index
    %c0_5 = arith.constant 0 : index
    %5 = vector.load %arg3[%c0_4, %c0_5] : memref<128x128xf32, #tpu.memory_space<vmem>>, vector<128x128xf32>
    %cst = arith.constant dense<0.000000e+00> : vector<32x128xf32>
    %6 = tpu.matmul %4, %5, %cst {dimension_numbers = #tpu.dot_dimension_numbers<[1], [0], [0], [1], [0, 0, 1, 1], [], []>} : vector<32x128xf32>, vector<128x128xf32>, vector<32x128xf32> -> vector<32x128xf32>
    %7 = arith.addf %3, %6 : vector<32x128xf32>
    %c0_6 = arith.constant 0 : index
    %c0_7 = arith.constant 0 : index
    %8 = vector.load %arg6[%c0_6, %c0_7] : memref<32x128xf32, #tpu.memory_space<vmem>>, vector<32x128xf32>
    tpu.vector_store %arg6[%c0_6, %c0_7], %7 {strides = array<i32>} : memref<32x128xf32, #tpu.memory_space<vmem>>, vector<32x128xf32>,
    %c0_i32_8 = arith.constant 0 : i32
    %9 = arith.cmpi eq, %arg1, %c0_i32_8 : i32
    %10 = arith.extui %9 : i1 to i32
    %c0_i32_9 = arith.constant 0 : i32
    %11 = arith.cmpi ne, %10, %c0_i32_9 : i32
    scf.if %11 {
      %c0_10 = arith.constant 0 : index
      %c0_11 = arith.constant 0 : index
      %12 = vector.load %arg6[%c0_10, %c0_11] : memref<32x128xf32, #tpu.memory_space<vmem>>, vector<32x128xf32>
      %c0_12 = arith.constant 0 : index
      %c0_13 = arith.constant 0 : index
      %13 = vector.load %arg4[%c0_12, %c0_13] : memref<32x1xf32, #tpu.memory_space<vmem>>, vector<32x1xf32>
      %14 = vector.broadcast %13 : vector<32x1xf32> to vector<32x128xf32>
      %15 = arith.mulf %12, %14 : vector<32x128xf32>
      %c0_14 = arith.constant 0 : index
      %c0_15 = arith.constant 0 : index
      %16 = vector.load %arg5[%c0_14, %c0_15] : memref<1x128xf32, #tpu.memory_space<vmem>>, vector<1x128xf32>
      %17 = vector.broadcast %16 : vector<1x128xf32> to vector<32x128xf32>
      %18 = arith.addf %15, %17 : vector<32x128xf32>
      %cst_16 = arith.constant 0.000000e+00 : f32
      %19 = vector.broadcast %cst_16 : f32 to vector<32x128xf32>
      %20 = arith.cmpf ogt, %18, %19 : vector<32x128xf32>
      %cst_17 = arith.constant 0.00999999977 : f32
      %21 = vector.broadcast %cst_17 : f32 to vector<32x128xf32>
      %22 = arith.mulf %21, %18 : vector<32x128xf32>
      %23 = arith.select %20, %18, %22 : vector<32x128xi1>, vector<32x128xf32>
      %c0_18 = arith.constant 0 : index
      %c0_19 = arith.constant 0 : index
      %24 = vector.load %arg6[%c0_18, %c0_19] : memref<32x128xf32, #tpu.memory_space<vmem>>, vector<32x128xf32>
      tpu.vector_store %arg6[%c0_18, %c0_19], %23 {strides = array<i32>} : memref<32x128xf32, #tpu.memory_space<vmem>>, vector<32x128xf32>,
    } else {
    }
    return
  }
  func.func @transform_0(%arg0: i32, %arg1: i32) -> (i32, i32) {
    %c0_i32 = arith.constant 0 : i32
    return %arg0, %arg1 : i32, i32
  }
  func.func @transform_1(%arg0: i32, %arg1: i32) -> (i32, i32) {
    %c0_i32 = arith.constant 0 : i32
    %c0_i32_0 = arith.constant 0 : i32
    return %arg1, %c0_i32 : i32, i32
  }
  func.func @transform_2(%arg0: i32, %arg1: i32) -> (i32, i32) {
    %c0_i32 = arith.constant 0 : i32
    %c0_i32_0 = arith.constant 0 : i32
    return %arg0, %c0_i32 : i32, i32
  }
  func.func @transform_3(%arg0: i32, %arg1: i32) -> (i32, i32) {
    %c0_i32 = arith.constant 0 : i32
    %c0_i32_0 = arith.constant 0 : i32
    %c0_i32_1 = arith.constant 0 : i32
    return %c0_i32, %c0_i32_0 : i32, i32
  }
  func.func @transform_4(%arg0: i32, %arg1: i32) -> (i32, i32) {
    %c0_i32 = arith.constant 0 : i32
    %c0_i32_0 = arith.constant 0 : i32
    return %arg0, %c0_i32 : i32, i32
  }
}

</mosaic_0001>

<llo_original>
// kernel: tpu_custom_call.1
$region0: #{tpu_custom_call.1}
  #allocation0 [shape = 'u32[]', space=smem, size = 0x4, offset = 0x4, fixed_abs, tag = 'smem constant byte address 0x4 - core index']
  #allocation1 [shape = 'u32[144,128]{1,0:T(1,128)}', space=vmem, size = 0x12000, scoped, tag = 'internal scratch']
  %s0 = inlined_call_operand.vmem [shape: f32[64,128], index: 0, kind: input, shape index: {}]
  %s1 = inlined_call_operand.hbm [shape: f32[128,128], index: 1, kind: input, shape index: {}]
  %s2 = inlined_call_operand.vmem [shape: f32[64,1], index: 2, kind: input, shape index: {}]
  %s3 = inlined_call_operand.vmem [shape: f32[1,128], index: 3, kind: input, shape index: {}]
  %s4 = inlined_call_operand.hbm [shape: f32[64,128], index: 4, kind: output, shape index: {}]
  %s5 = sld [smem:[#allocation0]]
  $region61: #{tpu_custom_call.1} parent=0
    _
  %s7 = ssub.s32 1, %s5
  %s8 = scalar_select 0, %s7, %s5
  $region1: #{tpu_custom_call.1} parent=0
    #allocation2 [shape = 'u8[65536]{0}', space=vmem, size = 0x10000, scoped, tag = 'input window, operand 1, single buffered']
    #allocation3 [shape = 's32[2]{0}', space=sflag, size = 0x8, scoped, tag = 'scoped memory for tpu_custom_call.1']
    #allocation4 [shape = 's32[2]{0}', space=sflag, size = 0x8, scoped, tag = 'scoped memory for tpu_custom_call.1']
    #allocation5 [shape = 'u8[32768]{0}', space=vmem, size = 0x8000, scoped, tag = 'output window, operand 0']
    %9 = vsyncpa [#allocation3], 0
    %10 = vsyncpa [#allocation4], 0
    %s11 = scalar_lea.sflag [#allocation4], 1
    %12 = vsyncpa %s11, 0
    loop: start=0, step=1, limit=4
    $region2: #{tpu_custom_call.1} parent=1 // loop_pre_header
      _
    $region3: #{tpu_custom_call.1} parent=1 // loop_header
      %s14 = sphi 0, %s18
      %p15 = scmp.ge.s32.totalorder %s14, 4
      %s21 = sphi 0, %s33
      %s22 = sphi 0, %s29
      %s23 = sphi 0, %s21
      %s24 = sphi 0, %s22
      %s25 = sphi 0, %s23
      %s26 = sphi 0, %s24
      %s38 = sphi 0, %s40
      %s41 = sphi 0, %s38
      %s42 = sphi 0, %s41
      %s58 = sphi 0, %s42
      %s64 = sphi 0, %s66
      %s67 = sphi 0, %s64
      %s68 = sphi 0, %s67
      %s84 = sphi 0, %s68
      %s90 = sphi 0, %s92
      %s93 = sphi 0, %s90
      %s94 = sphi 0, %s93
      %s110 = sphi 0, %s94
      %s114 = sphi 0, %s114
      %s116 = sphi 0, %s114
      %s117 = sphi 0, %s116
      %s131 = sphi 0, %s117
      %s137 = sphi 0, %s139
      %s140 = sphi 0, %s137
      %s141 = sphi 0, %s140
      %s157 = sphi 0, %s141
    $region4: #{tpu_custom_call.1} parent=1 // loop_header_branch
      %17 = sbr.rel (%p15) target = $region8
    $region5: #{tpu_custom_call.1} parent=1 // loop_body
      %s19 = ssub.s32 %s14, 1
      %s20 = ssub.s32 %s14, 2
      %s27 = sadd.s32 1, %s22
      %p28 = scmp.ge.s32.totalorder %s27, 1
      %s29 = scalar_select %p28, 0, %s27
      %s30 = sadd.s32 1, %s21
      %s31 = scalar_select %p28, %s30, %s21
      %p32 = scmp.ge.s32.totalorder %s31, 2
      %s33 = scalar_select %p32, 0, %s31
      %s34 = ssub.s32 %s21, %s33
      %s35 = ssub.s32 %s22, %s29
      %s36 = sor.u32 %s34, %s35
      %p37 = scmp.eq.s32.totalorder %s36, 0
      %s39 = sadd.s32 %s38, 1
      %s40 = scalar_select %p37, %s38, %s39
      %p43 = pneg %p37
      %p44 = scmp.eq.s32.totalorder %s14, 1
      %p45 = por %p43, %p44
      %p46 = scmp.ne.s32.totalorder %s38, %s41
      %p47 = scmp.eq.s32.totalorder %s14, 0
      %p48 = por %p46, %p47
      %p49 = scmp.ne.s32.totalorder %s38, %s41
      %p50 = scmp.eq.s32.totalorder %s19, 1
      %p51 = por %p49, %p50
      %p52 = scmp.ne.s32.totalorder %s41, %s42
      %p53 = scmp.eq.s32.totalorder %s19, 0
      %p54 = por %p52, %p53
      %p55 = scmp.ne.s32.totalorder %s41, %s42
      %p56 = scmp.eq.s32.totalorder %s20, 1
      %p57 = por %p55, %p56
      %p59 = scmp.ne.s32.totalorder %s42, %s58
      %p60 = scmp.eq.s32.totalorder %s20, 0
      %p61 = por %p59, %p60
      %s62 = ssub.s32 %s22, %s29
      %p63 = scmp.eq.s32.totalorder %s62, 0
      %s65 = sadd.s32 %s64, 1
      %s66 = scalar_select %p63, %s64, %s65
      %p69 = pneg %p63
      %p70 = scmp.eq.s32.totalorder %s14, 1
      %p71 = por %p69, %p70
      %p72 = scmp.ne.s32.totalorder %s64, %s67
      %p73 = scmp.eq.s32.totalorder %s14, 0
      %p74 = por %p72, %p73
      %p75 = scmp.ne.s32.totalorder %s64, %s67
      %p76 = scmp.eq.s32.totalorder %s19, 1
      %p77 = por %p75, %p76
      %p78 = scmp.ne.s32.totalorder %s67, %s68
      %p79 = scmp.eq.s32.totalorder %s19, 0
      %p80 = por %p78, %p79
      %p81 = scmp.ne.s32.totalorder %s67, %s68
      %p82 = scmp.eq.s32.totalorder %s20, 1
      %p83 = por %p81, %p82
      %p85 = scmp.ne.s32.totalorder %s68, %s84
      %p86 = scmp.eq.s32.totalorder %s20, 0
      %p87 = por %p85, %p86
      %s88 = ssub.s32 %s21, %s33
      %p89 = scmp.eq.s32.totalorder %s88, 0
      %s91 = sadd.s32 %s90, 1
      %s92 = scalar_select %p89, %s90, %s91
      %p95 = pneg %p89
      %p96 = scmp.eq.s32.totalorder %s14, 1
      %p97 = por %p95, %p96
      %p98 = scmp.ne.s32.totalorder %s90, %s93
      %p99 = scmp.eq.s32.totalorder %s14, 0
      %p100 = por %p98, %p99
      %p101 = scmp.ne.s32.totalorder %s90, %s93
      %p102 = scmp.eq.s32.totalorder %s19, 1
      %p103 = por %p101, %p102
      %p104 = scmp.ne.s32.totalorder %s93, %s94
      %p105 = scmp.eq.s32.totalorder %s19, 0
      %p106 = por %p104, %p105
      %p107 = scmp.ne.s32.totalorder %s93, %s94
      %p108 = scmp.eq.s32.totalorder %s20, 1
      %p109 = por %p107, %p108
      %p111 = scmp.ne.s32.totalorder %s94, %s110
      %p112 = scmp.eq.s32.totalorder %s20, 0
      %p113 = por %p111, %p112
      %s115 = sadd.s32 %s114, 1
      %p118 = scmp.eq.s32.totalorder %s14, 1
      %p119 = scmp.ne.s32.totalorder %s114, %s116
      %p120 = scmp.eq.s32.totalorder %s14, 0
      %p121 = por %p119, %p120
      %p122 = scmp.ne.s32.totalorder %s114, %s116
      %p123 = scmp.eq.s32.totalorder %s19, 1
      %p124 = por %p122, %p123
      %p125 = scmp.ne.s32.totalorder %s116, %s117
      %p126 = scmp.eq.s32.totalorder %s19, 0
      %p127 = por %p125, %p126
      %p128 = scmp.ne.s32.totalorder %s116, %s117
      %p129 = scmp.eq.s32.totalorder %s20, 1
      %p130 = por %p128, %p129
      %p132 = scmp.ne.s32.totalorder %s117, %s131
      %p133 = scmp.eq.s32.totalorder %s20, 0
      %p134 = por %p132, %p133
      %s135 = ssub.s32 %s21, %s33
      %p136 = scmp.eq.s32.totalorder %s135, 0
      %s138 = sadd.s32 %s137, 1
      %s139 = scalar_select %p136, %s137, %s138
      %p142 = pneg %p136
      %p143 = scmp.eq.s32.totalorder %s14, 1
      %p144 = por %p142, %p143
      %p145 = scmp.ne.s32.totalorder %s137, %s140
      %p146 = scmp.eq.s32.totalorder %s14, 0
      %p147 = por %p145, %p146
      %p148 = scmp.ne.s32.totalorder %s137, %s140
      %p149 = scmp.eq.s32.totalorder %s19, 1
      %p150 = por %p148, %p149
      %p151 = scmp.ne.s32.totalorder %s140, %s141
      %p152 = scmp.eq.s32.totalorder %s19, 0
      %p153 = por %p151, %p152
      %p154 = scmp.ne.s32.totalorder %s140, %s141
      %p155 = scmp.eq.s32.totalorder %s20, 1
      %p156 = por %p154, %p155
      %p158 = scmp.ne.s32.totalorder %s141, %s157
      %p159 = scmp.eq.s32.totalorder %s20, 0
      %p160 = por %p158, %p159
      %p161 = scmp.le.s32.totalorder 1, %s14
      %p162 = scmp.lt.s32.totalorder %s14, 3
      %p163 = pnand %p161, %p162
      %p164 = pneg %p163
      // Predicated region
      $region9: #{tpu_custom_call.1} parent=5 // pred_check
        _
      $region10: #{tpu_custom_call.1} parent=5 // pred_check_branch
        %166 = sbr.rel (%p163) target = $region12
      $region11: #{tpu_custom_call.1} parent=5 // pred_region
        %s167 = ssub.s32 %s14, 1
        // Predicated region
        $region13: #{tpu_custom_call.1} parent=11 // pred_check
          %p168 = pneg %p80
        $region14: #{tpu_custom_call.1} parent=11 // pred_check_branch
          %170 = sbr.rel (%p168) target = $region16
        $region15: #{tpu_custom_call.1} parent=11 // pred_region
          %s171 = smul.u32 16, %s24
          %s173 = ssub.s32 2048, 2048
          %174 = vsyncadd [#allocation3], %s173
          %s175 = smul.addr %s171, 128
          %s176 = scalar_lea.hbm %s1, %s175
          %s177 = sshll.u32 [#allocation2], 4
          %s178 = int_to_ptr.vmem [resolvable:$true] %s177
          %183 = dma.hbm_to_vmem [thread:$0]  %s176, 2048, %s178, [#allocation3], 128, 128, 8
        $region16: #{tpu_custom_call.1} parent=11 // pred_fallthru
          _
        // Predicated region
        $region17: #{tpu_custom_call.1} parent=11 // pred_check
          %p184 = pneg %p127
        $region18: #{tpu_custom_call.1} parent=11 // pred_check_branch
          %186 = sbr.rel (%p184) target = $region20
        $region19: #{tpu_custom_call.1} parent=11 // pred_region
          _
        $region20: #{tpu_custom_call.1} parent=11 // pred_fallthru
          _
      $region12: #{tpu_custom_call.1} parent=5 // pred_fallthru
        _
      %p187 = scmp.lt.s32.totalorder %s14, 2
      // Predicated region
      $region21: #{tpu_custom_call.1} parent=5 // pred_check
        %p188 = pneg %p187
      $region22: #{tpu_custom_call.1} parent=5 // pred_check_branch
        %190 = sbr.rel (%p188) target = $region24
      $region23: #{tpu_custom_call.1} parent=5 // pred_region
        // Predicated region
        $region25: #{tpu_custom_call.1} parent=23 // pred_check
          %p191 = pneg %p48
        $region26: #{tpu_custom_call.1} parent=23 // pred_check_branch
          %193 = sbr.rel (%p191) target = $region28
        $region27: #{tpu_custom_call.1} parent=23 // pred_region
          %s194 = smul.u32 4, %s21
          %p195 = scmp.lt.s32.totalorder %s194, 7
          %s196 = scalar_select %p195, %s194, 7
          %p197 = scmp.lt.s32.totalorder %s22, 0
          %s198 = scalar_select %p197, %s22, 0
          %s199 = sadd.s32 %s198, %s196
          %s200 = smul.addr %s199, 8
          %s201 = scalar_lea.vmem %s0, %s200
          %s202 = smul.u32 4, %s21
        $region28: #{tpu_custom_call.1} parent=23 // pred_fallthru
          _
        // Predicated region
        $region29: #{tpu_custom_call.1} parent=23 // pred_check
          %p203 = pneg %p100
        $region30: #{tpu_custom_call.1} parent=23 // pred_check_branch
          %205 = sbr.rel (%p203) target = $region32
        $region31: #{tpu_custom_call.1} parent=23 // pred_region
          %s206 = smul.u32 4, %s21
          %p207 = scmp.lt.s32.totalorder %s206, 7
          %s208 = scalar_select %p207, %s206, 7
          %s209 = smul.addr %s208, 8
          %s210 = scalar_lea.vmem %s2, %s209
          %s211 = smul.u32 4, %s21
        $region32: #{tpu_custom_call.1} parent=23 // pred_fallthru
          _
      $region24: #{tpu_custom_call.1} parent=5 // pred_fallthru
        _
      %p212 = scmp.le.s32.totalorder 1, %s14
      %p213 = scmp.lt.s32.totalorder %s14, 3
      %p214 = pnand %p212, %p213
      %p215 = pneg %p214
      // Predicated region
      $region33: #{tpu_custom_call.1} parent=5 // pred_check
        _
      $region34: #{tpu_custom_call.1} parent=5 // pred_check_branch
        %217 = sbr.rel (%p214) target = $region36
      $region35: #{tpu_custom_call.1} parent=5 // pred_region
        %s218 = ssub.s32 %s14, 1
        // Predicated region
        $region37: #{tpu_custom_call.1} parent=35 // pred_check
          %p219 = pneg %p80
        $region38: #{tpu_custom_call.1} parent=35 // pred_check_branch
          %221 = sbr.rel (%p219) target = $region40
        $region39: #{tpu_custom_call.1} parent=35 // pred_region
          %222 = dma.done [#allocation3], 2048
        $region40: #{tpu_custom_call.1} parent=35 // pred_fallthru
          _
        %s223 = smul.u32 4, %s23
        %p224 = scmp.lt.s32.totalorder %s223, 7
        %s225 = scalar_select %p224, %s223, 7
        %p226 = scmp.lt.s32.totalorder %s24, 0
        %s227 = scalar_select %p226, %s24, 0
        %s228 = sadd.s32 %s227, %s225
        %s229 = smul.addr %s228, 8
        %s230 = scalar_lea.vmem %s0, %s229
        %p231 = pneg %p54
        %p232 = pneg %p51
        %p233 = pneg %p80
        %p234 = pneg %p77
        %s235 = smul.u32 4, %s23
        %p236 = scmp.lt.s32.totalorder %s235, 7
        %s237 = scalar_select %p236, %s235, 7
        %s238 = smul.addr %s237, 8
        %s239 = scalar_lea.vmem %s2, %s238
        %p240 = pneg %p106
        %p241 = pneg %p103
        %p242 = pneg %p127
        %p243 = pneg %p124
        %p244 = pneg %p153
        %p245 = pneg %p150
        %s246 = sand.u32 %s140, 1
        %s247 = scalar_lea.sflag [#allocation4], %s246
        %s248 = sand.u32 %s140, 1
        %s249 = smul.addr %s248, 32
        %s250 = scalar_lea.vmem [#allocation5], %s249
        %s251 = smul.u32 4, %s23
        %p252 = scmp.lt.s32.totalorder %s251, 7
        %s253 = scalar_select %p252, %s251, 7
        %p254 = scmp.lt.s32.totalorder %s24, 0
        %s255 = scalar_select %p254, %s24, 0
        %s256 = sadd.s32 %s255, %s253
        %s257 = smul.addr %s256, 8
        %s258 = scalar_lea.vmem %s0, %s257
        %s259 = smul.u32 4, %s23
        %s260 = smul.u32 16, %s24
        %s261 = smul.u32 4, %s23
        %p262 = scmp.lt.s32.totalorder %s261, 7
        %s263 = scalar_select %p262, %s261, 7
        %s264 = smul.addr %s263, 8
        %s265 = scalar_lea.vmem %s2, %s264
        %s266 = smul.u32 4, %s23
        %s267 = smul.u32 4, %s23
        %p268 = scmp.eq.s32.totalorder %s24, 0
        // Predicated region
        $region41: #{tpu_custom_call.1} parent=35 // pred_check
          %p269 = pneg %p268
        $region42: #{tpu_custom_call.1} parent=35 // pred_check_branch
          %271 = sbr.rel (%p269) target = $region44
        $region43: #{tpu_custom_call.1} parent=35 // pred_region
          %272 = vst [vmem:[%s250] sm:$0xff] 0.0
          %273 = vst [vmem:[%s250 + $0x8] sm:$0xff] 0.0
          %274 = vst [vmem:[%s250 + $0x10] sm:$0xff] 0.0
          %275 = vst [vmem:[%s250 + $0x18] sm:$0xff] 0.0
        $region44: #{tpu_custom_call.1} parent=35 // pred_fallthru
          _
        %v276 = vld [vmem:[%s250] sm:$0xff]
        %v277 = vld [vmem:[%s250 + $0x8] sm:$0xff]
        %v278 = vld [vmem:[%s250 + $0x10] sm:$0xff]
        %v279 = vld [vmem:[%s250 + $0x18] sm:$0xff]
        %v280 = vld [vmem:[%s258] sm:$0xff]
        %v281 = vld [vmem:[%s258 + $0x8] sm:$0xff]
        %v282 = vld [vmem:[%s258 + $0x10] sm:$0xff]
        %v283 = vld [vmem:[%s258 + $0x18] sm:$0xff]
        %v284 = vld [vmem:[#allocation2] sm:$0xff]
        %v285 = vld [vmem:[#allocation2 + $0x8] sm:$0xff]
        %v286 = vld [vmem:[#allocation2 + $0x10] sm:$0xff]
        %v287 = vld [vmem:[#allocation2 + $0x18] sm:$0xff]
        %v288 = vld [vmem:[#allocation2 + $0x20] sm:$0xff]
        %v289 = vld [vmem:[#allocation2 + $0x28] sm:$0xff]
        %v290 = vld [vmem:[#allocation2 + $0x30] sm:$0xff]
        %v291 = vld [vmem:[#allocation2 + $0x38] sm:$0xff]
        %v292 = vld [vmem:[#allocation2 + $0x40] sm:$0xff]
        %v293 = vld [vmem:[#allocation2 + $0x48] sm:$0xff]
        %v294 = vld [vmem:[#allocation2 + $0x50] sm:$0xff]
        %v295 = vld [vmem:[#allocation2 + $0x58] sm:$0xff]
        %v296 = vld [vmem:[#allocation2 + $0x60] sm:$0xff]
        %v297 = vld [vmem:[#allocation2 + $0x68] sm:$0xff]
        %v298 = vld [vmem:[#allocation2 + $0x70] sm:$0xff]
        %v299 = vld [vmem:[#allocation2 + $0x78] sm:$0xff]
        %300 = vmatprep.subr.mxu0 0.0
        %301 = vmatpush1.msra.mxu0 %v284
        %302 = vmatprep.subr.mxu0 0.0
        %303 = vmatpush1.msra.mxu0 %v285
        %304 = vmatprep.subr.mxu0 0.0
        %305 = vmatpush1.msra.mxu0 %v286
        %306 = vmatprep.subr.mxu0 0.0
        %307 = vmatpush1.msra.mxu0 %v287
        %308 = vmatprep.subr.mxu0 0.0
        %309 = vmatpush1.msra.mxu0 %v288
        %310 = vmatprep.subr.mxu0 0.0
        %311 = vmatpush1.msra.mxu0 %v289
        %312 = vmatprep.subr.mxu0 0.0
        %313 = vmatpush1.msra.mxu0 %v290
        %314 = vmatprep.subr.mxu0 0.0
        %315 = vmatpush1.msra.mxu0 %v291
        %316 = vmatprep.subr.mxu0 0.0
        %317 = vmatpush1.msra.mxu0 %v292
        %318 = vmatprep.subr.mxu0 0.0
        %319 = vmatpush1.msra.mxu0 %v293
        %320 = vmatprep.subr.mxu0 0.0
        %321 = vmatpush1.msra.mxu0 %v294
        %322 = vmatprep.subr.mxu0 0.0
        %323 = vmatpush1.msra.mxu0 %v295
        %324 = vmatprep.subr.mxu0 0.0
        %325 = vmatpush1.msra.mxu0 %v296
        %326 = vmatprep.subr.mxu0 0.0
        %327 = vmatpush1.msra.mxu0 %v297
        %328 = vmatprep.subr.mxu0 0.0
        %329 = vmatpush1.msra.mxu0 %v298
        %330 = vmatprep.subr.mxu0 0.0
        %331 = vmatpush1.msra.mxu0 %v299
        %332 = vmatprep.subr.mxu0 0.0
        %333 = vmatpush1.msra.mxu0 0.0
        %334 = vmatprep.subr.mxu0 0.0
        %335 = vmatpush1.msra.mxu0 0.0
        %336 = vmatprep.subr.mxu0 0.0
        %337 = vmatpush1.msra.mxu0 0.0
        %338 = vmatprep.subr.mxu0 0.0
        %339 = vmatpush1.msra.mxu0 0.0
        %340 = vmatprep.subr.mxu0 0.0
        %341 = vmatpush1.msra.mxu0 0.0
        %342 = vmatprep.subr.mxu0 0.0
        %343 = vmatpush1.msra.mxu0 0.0
        %344 = vmatprep.subr.mxu0 0.0
        %345 = vmatpush1.msra.mxu0 0.0
        %346 = vmatprep.subr.mxu0 0.0
        %347 = vmatpush1.msra.mxu0 0.0
        %348 = vmatprep.subr.mxu0 0.0
        %349 = vmatpush1.msra.mxu0 0.0
        %350 = vmatprep.subr.mxu0 0.0
        %351 = vmatpush1.msra.mxu0 0.0
        %352 = vmatprep.subr.mxu0 0.0
        %353 = vmatpush1.msra.mxu0 0.0
        %354 = vmatprep.subr.mxu0 0.0
        %355 = vmatpush1.msra.mxu0 0.0
        %356 = vmatprep.subr.mxu0 0.0
        %357 = vmatpush1.msra.mxu0 0.0
        %358 = vmatprep.subr.mxu0 0.0
        %359 = vmatpush1.msra.mxu0 0.0
        %360 = vmatprep.subr.mxu0 0.0
        %361 = vmatpush1.msra.mxu0 0.0
        %362 = vmatprep.subr.mxu0 0.0
        %363 = vmatpush1.msra.mxu0 0.0
        %364 = vmatprep.mubr.f32.mxu0 0.0
        %365 = vmatmul.mubr.f32.gmra.mrb[0].mxu0 %v280
        %v366 = vpop.f32.mrb[0].mxu0
        %v367 = vadd.f32 0.0, %v366
        %v368 = vpop.f32.mrb[0].mxu0
        %369 = vmatprep.mubr.f32.mxu0 0.0
        %370 = vmatmul.mubr.f32.gmra.mrb[0].mxu0 %v281
        %v371 = vpop.f32.mrb[0].mxu0
        %v372 = vadd.f32 0.0, %v371
        %v373 = vpop.f32.mrb[0].mxu0
        %374 = vmatprep.mubr.f32.mxu0 0.0
        %375 = vmatmul.mubr.f32.gmra.mrb[0].mxu0 %v282
        %v376 = vpop.f32.mrb[0].mxu0
        %v377 = vadd.f32 0.0, %v376
        %v378 = vpop.f32.mrb[0].mxu0
        %379 = vmatprep.mubr.f32.mxu0 0.0
        %380 = vmatmul.mubr.f32.gmra.mrb[0].mxu0 %v283
        %v381 = vpop.f32.mrb[0].mxu0
        %v382 = vadd.f32 0.0, %v381
        %v383 = vpop.f32.mrb[0].mxu0
        %384 = vdwg.mxu0
        %v385 = vadd.f32 %v276, %v367
        %v386 = vadd.f32 %v277, %v372
        %v387 = vadd.f32 %v278, %v377
        %v388 = vadd.f32 %v279, %v382
        %389 = vst [vmem:[%s250] sm:$0xff] %v385
        %390 = vst [vmem:[%s250 + $0x8] sm:$0xff] %v386
        %391 = vst [vmem:[%s250 + $0x10] sm:$0xff] %v387
        %392 = vst [vmem:[%s250 + $0x18] sm:$0xff] %v388
        // Predicated region
        $region45: #{tpu_custom_call.1} parent=35 // pred_check
          %p393 = pneg %p268
        $region46: #{tpu_custom_call.1} parent=35 // pred_check_branch
          %395 = sbr.rel (%p393) target = $region48
        $region47: #{tpu_custom_call.1} parent=35 // pred_region
          %v396 = vld [vmem:[%s250] sm:$0xff]
          %v397 = vld [vmem:[%s250 + $0x8] sm:$0xff]
          %v398 = vld [vmem:[%s250 + $0x10] sm:$0xff]
          %v399 = vld [vmem:[%s250 + $0x18] sm:$0xff]
          %v400 = vld [vmem:[%s265] sm:$0xff]
          %v401 = vld [vmem:[%s265 + $0x8] sm:$0xff]
          %v402 = vld [vmem:[%s265 + $0x10] sm:$0xff]
          %v403 = vld [vmem:[%s265 + $0x18] sm:$0xff]
          %405 = vset.pattern.permute.xlu0 0
          %406 = vperm.xlu0 %405, %v400
          %v407 = vpop.permute.xlu0 %406
          %410 = vset.pattern.permute.xlu0 0
          %411 = vperm.xlu0 %410, %v401
          %v412 = vpop.permute.xlu0 %411
          %415 = vset.pattern.permute.xlu0 0
          %416 = vperm.xlu0 %415, %v402
          %v417 = vpop.permute.xlu0 %416
          %420 = vset.pattern.permute.xlu0 0
          %421 = vperm.xlu0 %420, %v403
          %v422 = vpop.permute.xlu0 %421
          %v424 = vmul.f32 %v396, %v407
          %v425 = vmul.f32 %v397, %v412
          %v426 = vmul.f32 %v398, %v417
          %v427 = vmul.f32 %v399, %v422
          %v428 = vld [vmem:[%s3] sm:$0x1]
          %v430 = vlaneseq
          %v431 = vshrl.u32 %v430, 7
          %v432 = vsub.s32 0, %v431
          %v433 = vrot.slane %v428, %v432
          %v435 = vadd.f32 %v424, %v433
          %v436 = vadd.f32 %v425, %v433
          %v437 = vadd.f32 %v426, %v433
          %v438 = vadd.f32 %v427, %v433
          %vm439 = vcmp.gt.f32.partialorder %v435, 0.0
          %vm440 = vcmp.gt.f32.partialorder %v436, 0.0
          %vm441 = vcmp.gt.f32.partialorder %v437, 0.0
          %vm442 = vcmp.gt.f32.partialorder %v438, 0.0
          %v443 = vmul.f32 %v435, 0.01
          %v444 = vmul.f32 %v436, 0.01
          %v445 = vmul.f32 %v437, 0.01
          %v446 = vmul.f32 %v438, 0.01
          %v447 = vsel %vm439, %v435, %v443
          %v448 = vsel %vm440, %v436, %v444
          %v449 = vsel %vm441, %v437, %v445
          %v450 = vsel %vm442, %v438, %v446
          %451 = vst [vmem:[%s250] sm:$0xff] %v447
          %452 = vst [vmem:[%s250 + $0x8] sm:$0xff] %v448
          %453 = vst [vmem:[%s250 + $0x10] sm:$0xff] %v449
          %454 = vst [vmem:[%s250 + $0x18] sm:$0xff] %v450
        $region48: #{tpu_custom_call.1} parent=35 // pred_fallthru
          _
        %s455 = sand.u32 %s140, 1
        %s456 = scalar_lea.sflag [#allocation4], %s455
        %s457 = sand.u32 %s140, 1
        %s458 = smul.addr %s457, 32
        %s459 = scalar_lea.vmem [#allocation5], %s458
        // Predicated region
        $region49: #{tpu_custom_call.1} parent=35 // pred_check
          %p460 = pneg %p150
        $region50: #{tpu_custom_call.1} parent=35 // pred_check_branch
          %462 = sbr.rel (%p460) target = $region52
        $region51: #{tpu_custom_call.1} parent=35 // pred_region
          %s463 = smul.u32 4, %s23
          %s465 = ssub.s32 512, 512
          %466 = vsyncadd %s456, %s465
          %s467 = smul.addr %s463, 128
          %s468 = scalar_lea.hbm %s4, %s467
          %s469 = sshll.u32 %s459, 4
          %s470 = int_to_ptr.vmem [resolvable:$true] %s469
          %475 = dma.vmem_to_hbm [thread:$0]  %s470, 512, %s468, %s456, 128, 128, 8
        $region52: #{tpu_custom_call.1} parent=35 // pred_fallthru
          _
      $region36: #{tpu_custom_call.1} parent=5 // pred_fallthru
        _
      %p476 = scmp.le.s32.totalorder 2, %s14
      // Predicated region
      $region53: #{tpu_custom_call.1} parent=5 // pred_check
        %p477 = pneg %p476
      $region54: #{tpu_custom_call.1} parent=5 // pred_check_branch
        %479 = sbr.rel (%p477) target = $region56
      $region55: #{tpu_custom_call.1} parent=5 // pred_region
        %s480 = ssub.s32 %s14, 2
        // Predicated region
        $region57: #{tpu_custom_call.1} parent=55 // pred_check
          %p481 = pneg %p156
        $region58: #{tpu_custom_call.1} parent=55 // pred_check_branch
          %483 = sbr.rel (%p481) target = $region60
        $region59: #{tpu_custom_call.1} parent=55 // pred_region
          %s484 = sand.u32 %s141, 1
          %s485 = scalar_lea.sflag [#allocation4], %s484
          %s486 = sand.u32 %s141, 1
          %s487 = smul.addr %s486, 32
          %s488 = scalar_lea.vmem [#allocation5], %s487
          %489 = dma.done %s485, 512
        $region60: #{tpu_custom_call.1} parent=55 // pred_fallthru
          _
      $region56: #{tpu_custom_call.1} parent=5 // pred_fallthru
        _
    $region6: #{tpu_custom_call.1} parent=1 // loop_footer
      %s18 = sadd.s32 1, %s14
    $region7: #{tpu_custom_call.1} parent=1 // loop_footer_branch
      %13 = sbr.rel target = $region3
    $region8: #{tpu_custom_call.1} parent=1 // loop_exit
      _
    %490 = vsyncpa [#allocation3], 1
    %s491 = scalar_lea.sflag [#allocation3], 1
    %492 = vsyncpa %s491, 1
    %493 = vsyncpa [#allocation4], 1
    %s494 = scalar_lea.sflag [#allocation4], 1
    %495 = vsyncpa %s494, 1

</llo_original>
